<compile_context>
chip_gen: v7x
topology: tpu7x:2x2x1
jax: 0.10.0
libtpu: 0.0.40
codegen_flags: <defaults>
</compile_context>

<pallas_src>
import jax
import jax.numpy as jnp
from jax.experimental import pallas as pl
from jax.experimental.pallas import tpu as pltpu

LANE = 128
SUBLANE = 8
HIDDEN = 128  # fixed by the PyTorch module (nn.Linear(input_dim, 128), Linear(128,128))


def _round_up(x, m):
    return ((x + m - 1) // m) * m


def dqn_kernel(xt_ref, w1_ref, w2_ref, w3_ref, b_ref, out_ref):
    # xt_ref: (in_pad, tb) bf16   w1_ref: (hidden, in_pad) bf16
    # w2_ref: (hidden, hidden)    w3_ref: (out_sub, hidden)
    # b_ref : (hidden, 3) f32, columns = [b1, b2, b3(padded)]
    b = b_ref[...]
    # fc1 + relu: h1^T = relu(W1 @ x^T + b1) -> (hidden, tb), f32 accumulate on MXU
    h1 = jnp.dot(w1_ref[...], xt_ref[...], preferred_element_type=jnp.float32)
    h1 = jnp.maximum(h1 + b[:, 0:1], 0.0)
    # fc2 + relu
    h2 = jnp.dot(w2_ref[...], h1.astype(jnp.bfloat16),
                 preferred_element_type=jnp.float32)
    h2 = jnp.maximum(h2 + b[:, 1:2], 0.0)
    # fc3 (no activation): (out_sub, tb) block -> unmasked lane-dense f32 store
    out = jnp.dot(w3_ref[...], h2.astype(jnp.bfloat16),
                  preferred_element_type=jnp.float32)
    out_ref[...] = out + b[: out_ref.shape[0], 2:3]


def prepare_params(params):
    """One-time packing of weights/biases into kernel-ready layouts (off the hot path)."""
    w1, b1, w2, b2, w3, b3 = params           # w: (fan_in, fan_out) f32, b: (1, fan_out)
    in_dim, hidden = w1.shape
    out_dim = w3.shape[1]
    in_pad = _round_up(max(in_dim, SUBLANE), SUBLANE)
    out_sub = _round_up(max(out_dim, SUBLANE), SUBLANE)

    # Transposed (out, in) bf16 weights, zero-padded to sublane-aligned shapes.
    w1t = jnp.zeros((hidden, in_pad), jnp.bfloat16).at[:, :in_dim].set(
        w1.T.astype(jnp.bfloat16))
    w2t = w2.T.astype(jnp.bfloat16)
    w3t = jnp.zeros((out_sub, hidden), jnp.bfloat16).at[:out_dim, :].set(
        w3.T.astype(jnp.bfloat16))

    # All three biases as columns of a single resident f32 operand (one DMA).
    bpack = jnp.zeros((hidden, 3), jnp.float32)
    bpack = bpack.at[:, 0].set(b1.reshape(-1))
    bpack = bpack.at[:, 1].set(b2.reshape(-1))
    bpack = bpack.at[:out_dim, 2].set(b3.reshape(-1))

    return dict(w1t=w1t, w2t=w2t, w3t=w3t, bpack=bpack,
                in_dim=in_dim, hidden=hidden, out_dim=out_dim,
                in_pad=in_pad, out_sub=out_sub)


def dqn_forward(x, packed, *, tb=4096):
    """3-layer MLP forward. x: [B, in_dim] f32 -> [B, out_dim] f32."""
    B, in_dim = x.shape
    assert in_dim == packed["in_dim"]
    hidden, out_dim = packed["hidden"], packed["out_dim"]
    in_pad, out_sub = packed["in_pad"], packed["out_sub"]

    # Batch lives on the lane axis. Pad to a multiple of 128; pick a tile count that is
    # even when >1 (v7x: two TensorCores on the "parallel" axis), then size tb from it
    # so batch padding stays minimal.
    b_lane = _round_up(max(B, LANE), LANE)
    n_tiles = max(1, pl.cdiv(b_lane, tb))
    if n_tiles > 1 and n_tiles % 2:
        n_tiles += 1
    tb_eff = _round_up(pl.cdiv(b_lane, n_tiles), LANE)
    b_padded = n_tiles * tb_eff

    # Single per-call pass over x: transpose + pad + bf16 cast (fused by XLA).
    xt = jnp.zeros((in_pad, b_padded), jnp.bfloat16)
    xt = xt.at[:in_dim, :B].set(x.T.astype(jnp.bfloat16))

    flops = 2 * b_padded * (in_pad * hidden + hidden * hidden + hidden * out_sub)
    bytes_accessed = (xt.size * 2 + packed["w1t"].size * 2 + packed["w2t"].size * 2
                      + packed["w3t"].size * 2 + packed["bpack"].size * 4
                      + out_sub * b_padded * 4)

    out_t = pl.pallas_call(
        dqn_kernel,
        out_shape=jax.ShapeDtypeStruct((out_sub, b_padded), jnp.float32),
        grid=(n_tiles,),
        in_specs=[
            pl.BlockSpec((in_pad, tb_eff), lambda i: (0, i)),    # x^T: tiled over batch lanes
            pl.BlockSpec((hidden, in_pad), lambda i: (0, 0)),    # W1: resident
            pl.BlockSpec((hidden, hidden), lambda i: (0, 0)),    # W2: resident
            pl.BlockSpec((out_sub, hidden), lambda i: (0, 0)),   # W3: resident
            pl.BlockSpec((hidden, 3), lambda i: (0, 0)),         # packed biases: resident
        ],
        out_specs=pl.BlockSpec((out_sub, tb_eff), lambda i: (0, i)),
        compiler_params=pltpu.CompilerParams(
            dimension_semantics=("parallel",),
            vmem_limit_bytes=32 * 1024 * 1024,
        ),
        cost_estimate=pl.CostEstimate(
            flops=flops, transcendentals=0, bytes_accessed=bytes_accessed),
    )(xt, packed["w1t"], packed["w2t"], packed["w3t"], packed["bpack"])

    # Slice off padded rows/lanes and return in the module's [B, out_dim] layout.
    return out_t[:out_dim, :B].T


def init_params(key, input_dim, hidden_dim, output_dim):
    """Deterministic init mimicking PyTorch nn.Linear default (uniform +/- 1/sqrt(fan_in))."""
    ks = jax.random.split(key, 6)

    def linear(kw, kb, fan_in, fan_out):
        bound = 1.0 / jnp.sqrt(fan_in)
        w = jax.random.uniform(kw, (fan_in, fan_out), jnp.float32, -bound, bound)
        b = jax.random.uniform(kb, (1, fan_out), jnp.float32, -bound, bound)
        return w, b

    w1, b1 = linear(ks[0], ks[1], input_dim, hidden_dim)
    w2, b2 = linear(ks[2], ks[3], hidden_dim, hidden_dim)
    w3, b3 = linear(ks[4], ks[5], hidden_dim, output_dim)
    return (w1, b1, w2, b2, w3, b3)


def dqn_reference(x, params):
    w1, b1, w2, b2, w3, b3 = params
    h1 = jnp.maximum(x @ w1 + b1, 0.0)
    h2 = jnp.maximum(h1 @ w2 + b2, 0.0)
    return h2 @ w3 + b3


if __name__ == "__main__":
    key = jax.random.PRNGKey(0)
    B, input_dim, output_dim = 8, 4, 2   # CartPole-like state/action dims; hidden fixed at 128

    k_x, k_p, k_x2 = jax.random.split(key, 3)
    x = jax.random.normal(k_x, (B, input_dim), jnp.float32)
    params = init_params(k_p, input_dim, HIDDEN, output_dim)
    packed = prepare_params(params)      # one-time packing, hoisted out of the hot path

    # Small-batch inference path (grid=(1,)).
    out = dqn_forward(x, packed)
    jax.block_until_ready(out)
    ref = dqn_reference(x, params)
    assert out.shape == (B, output_dim)
    # bf16 inputs/weights on the MXU (f32 accumulate) -> loosened tolerance.
    assert jnp.allclose(out, ref, atol=2e-2, rtol=2e-2), (
        float(jnp.max(jnp.abs(out - ref))))

    # Multi-tile path: awkward batch size, small tb to force an even multi-step grid.
    B2 = 600
    x2 = jax.random.normal(k_x2, (B2, input_dim), jnp.float32)
    out2 = dqn_forward(x2, packed, tb=256)
    jax.block_until_ready(out2)
    ref2 = dqn_reference(x2, params)
    assert out2.shape == (B2, output_dim)
    assert jnp.allclose(out2, ref2, atol=2e-2, rtol=2e-2), (
        float(jnp.max(jnp.abs(out2 - ref2))))

    print("KERNEL_OK")
</pallas_src>

<mosaic_0001>
module attributes {stable_mosaic.version = 11 : i64} {
  func.func @dqn_kernel(%arg0: i32, %arg1: memref<8x128xbf16, #tpu.memory_space<vmem>>, %arg2: memref<128x8xbf16, #tpu.memory_space<vmem>>, %arg3: memref<128x128xbf16, #tpu.memory_space<vmem>>, %arg4: memref<8x128xbf16, #tpu.memory_space<vmem>>, %arg5: memref<128x3xf32, #tpu.memory_space<vmem>>, %arg6: memref<8x128xf32, #tpu.memory_space<vmem>>) attributes {dimension_semantics = [#tpu.dimension_semantics<parallel>], iteration_bounds = array<i64: 1>, scalar_prefetch = 0 : i64, scratch_operands = 0 : i64, tpu.core_type = #tpu.core_type<tc>, window_params = [{transform_indices = @transform_0, window_bounds = array<i64: 8, 128>}, {pipeline_mode = #tpu.pipeline_mode<synchronous>, transform_indices = @transform_1, window_bounds = array<i64: 128, 8>}, {pipeline_mode = #tpu.pipeline_mode<synchronous>, transform_indices = @transform_2, window_bounds = array<i64: 128, 128>}, {pipeline_mode = #tpu.pipeline_mode<synchronous>, transform_indices = @transform_3, window_bounds = array<i64: 8, 128>}, {pipeline_mode = #tpu.pipeline_mode<synchronous>, transform_indices = @transform_4, window_bounds = array<i64: 128, 3>}, {transform_indices = @transform_5, window_bounds = array<i64: 8, 128>}]} {
    %c0 = arith.constant 0 : index
    %c0_0 = arith.constant 0 : index
    %0 = vector.load %arg5[%c0, %c0_0] : memref<128x3xf32, #tpu.memory_space<vmem>>, vector<128x3xf32>
    %c0_1 = arith.constant 0 : index
    %c0_2 = arith.constant 0 : index
    %1 = vector.load %arg2[%c0_1, %c0_2] : memref<128x8xbf16, #tpu.memory_space<vmem>>, vector<128x8xbf16>
    %c0_3 = arith.constant 0 : index
    %c0_4 = arith.constant 0 : index
    %2 = vector.load %arg1[%c0_3, %c0_4] : memref<8x128xbf16, #tpu.memory_space<vmem>>, vector<8x128xbf16>
    %cst = arith.constant dense<0.000000e+00> : vector<128x128xf32>
    %3 = tpu.matmul %1, %2, %cst {dimension_numbers = #tpu.dot_dimension_numbers<[1], [0], [0], [1], [0, 0, 1, 1], [], []>} : vector<128x8xbf16>, vector<8x128xbf16>, vector<128x128xf32> -> vector<128x128xf32>
    %4 = vector.extract_strided_slice %0 {offsets = [0, 0], sizes = [128, 1], strides = [1, 1]} : vector<128x3xf32> to vector<128x1xf32>
    %5 = vector.broadcast %4 : vector<128x1xf32> to vector<128x128xf32>
    %6 = arith.addf %3, %5 : vector<128x128xf32>
    %cst_5 = arith.constant 0.000000e+00 : f32
    %7 = vector.broadcast %cst_5 : f32 to vector<128x128xf32>
    %8 = arith.maximumf %6, %7 : vector<128x128xf32>
    %c0_6 = arith.constant 0 : index
    %c0_7 = arith.constant 0 : index
    %9 = vector.load %arg3[%c0_6, %c0_7] : memref<128x128xbf16, #tpu.memory_space<vmem>>, vector<128x128xbf16>
    %10 = arith.truncf %8 : vector<128x128xf32> to vector<128x128xbf16>
    %cst_8 = arith.constant dense<0.000000e+00> : vector<128x128xf32>
    %11 = tpu.matmul %9, %10, %cst_8 {dimension_numbers = #tpu.dot_dimension_numbers<[1], [0], [0], [1], [0, 0, 1, 1], [], []>} : vector<128x128xbf16>, vector<128x128xbf16>, vector<128x128xf32> -> vector<128x128xf32>
    %12 = vector.extract_strided_slice %0 {offsets = [0, 1], sizes = [128, 1], strides = [1, 1]} : vector<128x3xf32> to vector<128x1xf32>
    %13 = vector.broadcast %12 : vector<128x1xf32> to vector<128x128xf32>
    %14 = arith.addf %11, %13 : vector<128x128xf32>
    %cst_9 = arith.constant 0.000000e+00 : f32
    %15 = vector.broadcast %cst_9 : f32 to vector<128x128xf32>
    %16 = arith.maximumf %14, %15 : vector<128x128xf32>
    %c0_10 = arith.constant 0 : index
    %c0_11 = arith.constant 0 : index
    %17 = vector.load %arg4[%c0_10, %c0_11] : memref<8x128xbf16, #tpu.memory_space<vmem>>, vector<8x128xbf16>
    %18 = arith.truncf %16 : vector<128x128xf32> to vector<128x128xbf16>
    %cst_12 = arith.constant dense<0.000000e+00> : vector<8x128xf32>
    %19 = tpu.matmul %17, %18, %cst_12 {dimension_numbers = #tpu.dot_dimension_numbers<[1], [0], [0], [1], [0, 0, 1, 1], [], []>} : vector<8x128xbf16>, vector<128x128xbf16>, vector<8x128xf32> -> vector<8x128xf32>
    %20 = vector.extract_strided_slice %0 {offsets = [0, 2], sizes = [8, 1], strides = [1, 1]} : vector<128x3xf32> to vector<8x1xf32>
    %21 = vector.broadcast %20 : vector<8x1xf32> to vector<8x128xf32>
    %22 = arith.addf %19, %21 : vector<8x128xf32>
    %c0_13 = arith.constant 0 : index
    %c0_14 = arith.constant 0 : index
    %23 = vector.load %arg6[%c0_13, %c0_14] : memref<8x128xf32, #tpu.memory_space<vmem>>, vector<8x128xf32>
    tpu.vector_store %arg6[%c0_13, %c0_14], %22 {strides = array<i32>} : memref<8x128xf32, #tpu.memory_space<vmem>>, vector<8x128xf32>,
    return
  }
  func.func @transform_0(%arg0: i32) -> (i32, i32) {
    %c0_i32 = arith.constant 0 : i32
    %c0_i32_0 = arith.constant 0 : i32
    return %c0_i32, %arg0 : i32, i32
  }
  func.func @transform_1(%arg0: i32) -> (i32, i32) {
    %c0_i32 = arith.constant 0 : i32
    %c0_i32_0 = arith.constant 0 : i32
    %c0_i32_1 = arith.constant 0 : i32
    return %c0_i32, %c0_i32_0 : i32, i32
  }
  func.func @transform_2(%arg0: i32) -> (i32, i32) {
    %c0_i32 = arith.constant 0 : i32
    %c0_i32_0 = arith.constant 0 : i32
    %c0_i32_1 = arith.constant 0 : i32
    return %c0_i32, %c0_i32_0 : i32, i32
  }
  func.func @transform_3(%arg0: i32) -> (i32, i32) {
    %c0_i32 = arith.constant 0 : i32
    %c0_i32_0 = arith.constant 0 : i32
    %c0_i32_1 = arith.constant 0 : i32
    return %c0_i32, %c0_i32_0 : i32, i32
  }
  func.func @transform_4(%arg0: i32) -> (i32, i32) {
    %c0_i32 = arith.constant 0 : i32
    %c0_i32_0 = arith.constant 0 : i32
    %c0_i32_1 = arith.constant 0 : i32
    return %c0_i32, %c0_i32_0 : i32, i32
  }
  func.func @transform_5(%arg0: i32) -> (i32, i32) {
    %c0_i32 = arith.constant 0 : i32
    %c0_i32_0 = arith.constant 0 : i32
    return %c0_i32, %arg0 : i32, i32
  }
}

</mosaic_0001>

<llo_original>
// kernel: tpu_custom_call.1
$region0: #{tpu_custom_call.1}
  #allocation0 [shape = 'u32[]', space=smem, size = 0x4, offset = 0x4, fixed_abs, tag = 'smem constant byte address 0x4 - core index']
  #allocation1 [shape = 'u32[144,128]{1,0:T(1,128)}', space=vmem, size = 0x12000, scoped, tag = 'internal scratch']
  %s0 = inlined_call_operand.vmem [shape: bf16[8,128], index: 0, kind: input, shape index: {}]
  %s1 = inlined_call_operand.vmem [shape: bf16[128,8], index: 1, kind: input, shape index: {}]
  %s2 = inlined_call_operand.vmem [shape: bf16[128,128], index: 2, kind: input, shape index: {}]
  %s3 = inlined_call_operand.vmem [shape: bf16[8,128], index: 3, kind: input, shape index: {}]
  %s4 = inlined_call_operand.vmem [shape: f32[128,3], index: 4, kind: input, shape index: {}]
  %s5 = inlined_call_operand.hbm [shape: f32[8,128], index: 5, kind: output, shape index: {}]
  %s6 = sld [smem:[#allocation0]]
  $region30: #{tpu_custom_call.1} parent=0
    _
  %s8 = ssub.s32 1, %s6
  %s9 = scalar_select 0, %s8, %s6
  $region1: #{tpu_custom_call.1} parent=0
    #allocation2 [shape = 'u8[4096]{0}', space=vmem, size = 0x1000, scoped, tag = 'output window, operand 0, single buffered']
    #allocation3 [shape = 's32[1]{0}', space=sflag, size = 0x4, scoped, tag = 'scoped memory for tpu_custom_call.1']
    %10 = vsyncpa [#allocation3], 0
    // Predicated region
    $region2: #{tpu_custom_call.1} parent=1 // pred_check
      _
    $region3: #{tpu_custom_call.1} parent=1 // pred_check_branch
      %12 = sbr.rel (0) target = $region5
    $region4: #{tpu_custom_call.1} parent=1 // pred_region
      _
    $region5: #{tpu_custom_call.1} parent=1 // pred_fallthru
      _
    // Predicated region
    $region6: #{tpu_custom_call.1} parent=1 // pred_check
      _
    $region7: #{tpu_custom_call.1} parent=1 // pred_check_branch
      %14 = sbr.rel (0) target = $region9
    $region8: #{tpu_custom_call.1} parent=1 // pred_region
      _
    $region9: #{tpu_custom_call.1} parent=1 // pred_fallthru
      _
    // Predicated region
    $region10: #{tpu_custom_call.1} parent=1 // pred_check
      _
    $region11: #{tpu_custom_call.1} parent=1 // pred_check_branch
      %16 = sbr.rel (0) target = $region13
    $region12: #{tpu_custom_call.1} parent=1 // pred_region
      _
    $region13: #{tpu_custom_call.1} parent=1 // pred_fallthru
      _
    // Predicated region
    $region14: #{tpu_custom_call.1} parent=1 // pred_check
      _
    $region15: #{tpu_custom_call.1} parent=1 // pred_check_branch
      %18 = sbr.rel (0) target = $region17
    $region16: #{tpu_custom_call.1} parent=1 // pred_region
      _
    $region17: #{tpu_custom_call.1} parent=1 // pred_fallthru
      _
    // Predicated region
    $region18: #{tpu_custom_call.1} parent=1 // pred_check
      _
    $region19: #{tpu_custom_call.1} parent=1 // pred_check_branch
      %20 = sbr.rel (0) target = $region21
    $region20: #{tpu_custom_call.1} parent=1 // pred_region
      _
    $region21: #{tpu_custom_call.1} parent=1 // pred_fallthru
      _
    %v22 = vld [vmem:[%s4] sm:$0xff]
    %v23 = vld [vmem:[%s4 + $0x8] sm:$0xff]
    %v24 = vld [vmem:[%s4 + $0x10] sm:$0xff]
    %v25 = vld [vmem:[%s4 + $0x18] sm:$0xff]
    %v26 = vld [vmem:[%s4 + $0x20] sm:$0xff]
    %v27 = vld [vmem:[%s4 + $0x28] sm:$0xff]
    %v28 = vld [vmem:[%s4 + $0x30] sm:$0xff]
    %v29 = vld [vmem:[%s4 + $0x38] sm:$0xff]
    %v30 = vld [vmem:[%s4 + $0x40] sm:$0xff]
    %v31 = vld [vmem:[%s4 + $0x48] sm:$0xff]
    %v32 = vld [vmem:[%s4 + $0x50] sm:$0xff]
    %v33 = vld [vmem:[%s4 + $0x58] sm:$0xff]
    %v34 = vld [vmem:[%s4 + $0x60] sm:$0xff]
    %v35 = vld [vmem:[%s4 + $0x68] sm:$0xff]
    %v36 = vld [vmem:[%s4 + $0x70] sm:$0xff]
    %v37 = vld [vmem:[%s4 + $0x78] sm:$0xff]
    %v38 = vld [vmem:[%s1] sm:$0xf]
    %v39 = vld [vmem:[%s1 + $0x4] sm:$0xf]
    %v40 = vld [vmem:[%s1 + $0x8] sm:$0xf]
    %v41 = vld [vmem:[%s1 + $0xc] sm:$0xf]
    %v42 = vld [vmem:[%s1 + $0x10] sm:$0xf]
    %v43 = vld [vmem:[%s1 + $0x14] sm:$0xf]
    %v44 = vld [vmem:[%s1 + $0x18] sm:$0xf]
    %v45 = vld [vmem:[%s1 + $0x1c] sm:$0xf]
    %v46 = vld [vmem:[%s1 + $0x20] sm:$0xf]
    %v47 = vld [vmem:[%s1 + $0x24] sm:$0xf]
    %v48 = vld [vmem:[%s1 + $0x28] sm:$0xf]
    %v49 = vld [vmem:[%s1 + $0x2c] sm:$0xf]
    %v50 = vld [vmem:[%s1 + $0x30] sm:$0xf]
    %v51 = vld [vmem:[%s1 + $0x34] sm:$0xf]
    %v52 = vld [vmem:[%s1 + $0x38] sm:$0xf]
    %v53 = vld [vmem:[%s1 + $0x3c] sm:$0xf]
    %v54 = vld [vmem:[%s0] sm:$0xf]
    %56 = vset.pattern.permute.xlu0 0
    %57 = vperm.xlu0 %56, %v22
    %v58 = vpop.permute.xlu0 %57
    %61 = vset.pattern.permute.xlu0 0
    %62 = vperm.xlu0 %61, %v23
    %v63 = vpop.permute.xlu0 %62
    %66 = vset.pattern.permute.xlu0 0
    %67 = vperm.xlu0 %66, %v24
    %v68 = vpop.permute.xlu0 %67
    %71 = vset.pattern.permute.xlu0 0
    %72 = vperm.xlu0 %71, %v25
    %v73 = vpop.permute.xlu0 %72
    %76 = vset.pattern.permute.xlu0 0
    %77 = vperm.xlu0 %76, %v26
    %v78 = vpop.permute.xlu0 %77
    %81 = vset.pattern.permute.xlu0 0
    %82 = vperm.xlu0 %81, %v27
    %v83 = vpop.permute.xlu0 %82
    %86 = vset.pattern.permute.xlu0 0
    %87 = vperm.xlu0 %86, %v28
    %v88 = vpop.permute.xlu0 %87
    %91 = vset.pattern.permute.xlu0 0
    %92 = vperm.xlu0 %91, %v29
    %v93 = vpop.permute.xlu0 %92
    %96 = vset.pattern.permute.xlu0 0
    %97 = vperm.xlu0 %96, %v30
    %v98 = vpop.permute.xlu0 %97
    %101 = vset.pattern.permute.xlu0 0
    %102 = vperm.xlu0 %101, %v31
    %v103 = vpop.permute.xlu0 %102
    %106 = vset.pattern.permute.xlu0 0
    %107 = vperm.xlu0 %106, %v32
    %v108 = vpop.permute.xlu0 %107
    %111 = vset.pattern.permute.xlu0 0
    %112 = vperm.xlu0 %111, %v33
    %v113 = vpop.permute.xlu0 %112
    %116 = vset.pattern.permute.xlu0 0
    %117 = vperm.xlu0 %116, %v34
    %v118 = vpop.permute.xlu0 %117
    %121 = vset.pattern.permute.xlu0 0
    %122 = vperm.xlu0 %121, %v35
    %v123 = vpop.permute.xlu0 %122
    %126 = vset.pattern.permute.xlu0 0
    %127 = vperm.xlu0 %126, %v36
    %v128 = vpop.permute.xlu0 %127
    %131 = vset.pattern.permute.xlu0 0
    %132 = vperm.xlu0 %131, %v37
    %v133 = vpop.permute.xlu0 %132
    %v151 = vunpack.c.l.b16 %v38
    %v152 = vunpack.c.l.b16 %v39
    %v153 = vunpack.c.l.b16 %v40
    %v154 = vunpack.c.l.b16 %v41
    %v155 = vunpack.c.l.b16 %v42
    %v156 = vunpack.c.l.b16 %v43
    %v157 = vunpack.c.l.b16 %v44
    %v158 = vunpack.c.l.b16 %v45
    %v159 = vunpack.c.l.b16 %v46
    %v160 = vunpack.c.l.b16 %v47
    %v161 = vunpack.c.l.b16 %v48
    %v162 = vunpack.c.l.b16 %v49
    %v163 = vunpack.c.l.b16 %v50
    %v164 = vunpack.c.l.b16 %v51
    %v165 = vunpack.c.l.b16 %v52
    %v166 = vunpack.c.l.b16 %v53
    %v167 = vpack.c.b16 %v152, %v151
    %v168 = vpack.c.b16 %v154, %v153
    %v169 = vpack.c.b16 %v156, %v155
    %v170 = vpack.c.b16 %v158, %v157
    %v171 = vpack.c.b16 %v160, %v159
    %v172 = vpack.c.b16 %v162, %v161
    %v173 = vpack.c.b16 %v164, %v163
    %v174 = vpack.c.b16 %v166, %v165
    %vm175 = vcmask 64512
    %v177 = vsel %vm175, %v167, 0
    %v180 = vsel %vm175, %v168, 0
    %v183 = vsel %vm175, %v169, 0
    %v186 = vsel %vm175, %v170, 0
    %v189 = vsel %vm175, %v171, 0
    %v192 = vsel %vm175, %v172, 0
    %v195 = vsel %vm175, %v173, 0
    %v198 = vsel %vm175, %v174, 0
    %vm200 = vcmask 1043456
    %v202 = vsel %vm200, %v54, 0
    %204 = vmatprep.subr.bf16.mxu0 0
    %205 = vmatpush1.bf16.msra.mxu0 %v202
    %206 = vmatprep.subr.bf16.mxu0 0
    %207 = vmatpush1.bf16.msra.mxu0 0
    %208 = vmatprep.subr.bf16.mxu0 0
    %209 = vmatpush1.bf16.msra.mxu0 0
    %210 = vmatprep.subr.bf16.mxu0 0
    %211 = vmatpush1.bf16.msra.mxu0 0
    %212 = vmatprep.subr.bf16.mxu0 0
    %213 = vmatpush1.bf16.msra.mxu0 0
    %214 = vmatprep.subr.bf16.mxu0 0
    %215 = vmatpush1.bf16.msra.mxu0 0
    %216 = vmatprep.subr.bf16.mxu0 0
    %217 = vmatpush1.bf16.msra.mxu0 0
    %218 = vmatprep.subr.bf16.mxu0 0
    %219 = vmatpush1.bf16.msra.mxu0 0
    %220 = vmatprep.subr.bf16.mxu0 0
    %221 = vmatpush1.bf16.msra.mxu0 0
    %222 = vmatprep.subr.bf16.mxu0 0
    %223 = vmatpush1.bf16.msra.mxu0 0
    %224 = vmatprep.subr.bf16.mxu0 0
    %225 = vmatpush1.bf16.msra.mxu0 0
    %226 = vmatprep.subr.bf16.mxu0 0
    %227 = vmatpush1.bf16.msra.mxu0 0
    %228 = vmatprep.subr.bf16.mxu0 0
    %229 = vmatpush1.bf16.msra.mxu0 0
    %230 = vmatprep.subr.bf16.mxu0 0
    %231 = vmatpush1.bf16.msra.mxu0 0
    %232 = vmatprep.subr.bf16.mxu0 0
    %233 = vmatpush1.bf16.msra.mxu0 0
    %234 = vmatprep.subr.bf16.mxu0 0
    %235 = vmatpush1.bf16.msra.mxu0 0
    %236 = vmatprep.mubr.bf16.mxu0 0
    %237 = vmatmul.mubr.bf16.gmra.mrb[0].mxu0 %v177
    %v238 = vpop.f32.mrb[0].mxu0
    %v239 = vadd.f32 %v58, %v238
    %v240 = vpop.f32.mrb[0].mxu0
    %v241 = vpop.f32.mrb[0].mxu0
    %v242 = vadd.f32 %v63, %v241
    %v243 = vpop.f32.mrb[0].mxu0
    %244 = vmatprep.mubr.bf16.mxu0 0
    %245 = vmatmul.mubr.bf16.gmra.mrb[0].mxu0 %v180
    %v246 = vpop.f32.mrb[0].mxu0
    %v247 = vadd.f32 %v68, %v246
    %v248 = vpop.f32.mrb[0].mxu0
    %v249 = vpop.f32.mrb[0].mxu0
    %v250 = vadd.f32 %v73, %v249
    %v251 = vpop.f32.mrb[0].mxu0
    %252 = vmatprep.mubr.bf16.mxu0 0
    %253 = vmatmul.mubr.bf16.gmra.mrb[0].mxu0 %v183
    %v254 = vpop.f32.mrb[0].mxu0
    %v255 = vadd.f32 %v78, %v254
    %v256 = vpop.f32.mrb[0].mxu0
    %v257 = vpop.f32.mrb[0].mxu0
    %v258 = vadd.f32 %v83, %v257
    %v259 = vpop.f32.mrb[0].mxu0
    %260 = vmatprep.mubr.bf16.mxu0 0
    %261 = vmatmul.mubr.bf16.gmra.mrb[0].mxu0 %v186
    %v262 = vpop.f32.mrb[0].mxu0
    %v263 = vadd.f32 %v88, %v262
    %v264 = vpop.f32.mrb[0].mxu0
    %v265 = vpop.f32.mrb[0].mxu0
    %v266 = vadd.f32 %v93, %v265
    %v267 = vpop.f32.mrb[0].mxu0
    %268 = vmatprep.mubr.bf16.mxu0 0
    %269 = vmatmul.mubr.bf16.gmra.mrb[0].mxu0 %v189
    %v270 = vpop.f32.mrb[0].mxu0
    %v271 = vadd.f32 %v98, %v270
    %v272 = vpop.f32.mrb[0].mxu0
    %v273 = vpop.f32.mrb[0].mxu0
    %v274 = vadd.f32 %v103, %v273
    %v275 = vpop.f32.mrb[0].mxu0
    %276 = vmatprep.mubr.bf16.mxu0 0
    %277 = vmatmul.mubr.bf16.gmra.mrb[0].mxu0 %v192
    %v278 = vpop.f32.mrb[0].mxu0
    %v279 = vadd.f32 %v108, %v278
    %v280 = vpop.f32.mrb[0].mxu0
    %v281 = vpop.f32.mrb[0].mxu0
    %v282 = vadd.f32 %v113, %v281
    %v283 = vpop.f32.mrb[0].mxu0
    %284 = vmatprep.mubr.bf16.mxu0 0
    %285 = vmatmul.mubr.bf16.gmra.mrb[0].mxu0 %v195
    %v286 = vpop.f32.mrb[0].mxu0
    %v287 = vadd.f32 %v118, %v286
    %v288 = vpop.f32.mrb[0].mxu0
    %v289 = vpop.f32.mrb[0].mxu0
    %v290 = vadd.f32 %v123, %v289
    %v291 = vpop.f32.mrb[0].mxu0
    %292 = vmatprep.mubr.bf16.mxu0 0
    %293 = vmatmul.mubr.bf16.gmra.mrb[0].mxu0 %v198
    %v294 = vpop.f32.mrb[0].mxu0
    %v295 = vadd.f32 %v128, %v294
    %v296 = vpop.f32.mrb[0].mxu0
    %v297 = vpop.f32.mrb[0].mxu0
    %v298 = vadd.f32 %v133, %v297
    %v299 = vpop.f32.mrb[0].mxu0
    %300 = vdwg.mxu0
    %v301 = vmax.f32 %v239, 0.0
    %v302 = vmax.f32 %v242, 0.0
    %v303 = vmax.f32 %v247, 0.0
    %v304 = vmax.f32 %v250, 0.0
    %v305 = vmax.f32 %v255, 0.0
    %v306 = vmax.f32 %v258, 0.0
    %v307 = vmax.f32 %v263, 0.0
    %v308 = vmax.f32 %v266, 0.0
    %v309 = vmax.f32 %v271, 0.0
    %v310 = vmax.f32 %v274, 0.0
    %v311 = vmax.f32 %v279, 0.0
    %v312 = vmax.f32 %v282, 0.0
    %v313 = vmax.f32 %v287, 0.0
    %v314 = vmax.f32 %v290, 0.0
    %v315 = vmax.f32 %v295, 0.0
    %v316 = vmax.f32 %v298, 0.0
    %v317 = vld [vmem:[%s2] sm:$0xf]
    %v318 = vld [vmem:[%s2 + $0x4] sm:$0xf]
    %v319 = vld [vmem:[%s2 + $0x8] sm:$0xf]
    %v320 = vld [vmem:[%s2 + $0xc] sm:$0xf]
    %v321 = vld [vmem:[%s2 + $0x10] sm:$0xf]
    %v322 = vld [vmem:[%s2 + $0x14] sm:$0xf]
    %v323 = vld [vmem:[%s2 + $0x18] sm:$0xf]
    %v324 = vld [vmem:[%s2 + $0x1c] sm:$0xf]
    %v325 = vld [vmem:[%s2 + $0x20] sm:$0xf]
    %v326 = vld [vmem:[%s2 + $0x24] sm:$0xf]
    %v327 = vld [vmem:[%s2 + $0x28] sm:$0xf]
    %v328 = vld [vmem:[%s2 + $0x2c] sm:$0xf]
    %v329 = vld [vmem:[%s2 + $0x30] sm:$0xf]
    %v330 = vld [vmem:[%s2 + $0x34] sm:$0xf]
    %v331 = vld [vmem:[%s2 + $0x38] sm:$0xf]
    %v332 = vld [vmem:[%s2 + $0x3c] sm:$0xf]
    %v333 = vpack.c.bf16 %v302, %v301
    %v334 = vpack.c.bf16 %v304, %v303
    %v335 = vpack.c.bf16 %v306, %v305
    %v336 = vpack.c.bf16 %v308, %v307
    %v337 = vpack.c.bf16 %v310, %v309
    %v338 = vpack.c.bf16 %v312, %v311
    %v339 = vpack.c.bf16 %v314, %v313
    %v340 = vpack.c.bf16 %v316, %v315
    %341 = vset.pattern.permute.xlu0 1
    %342 = vperm.xlu0 %341, %v22
    %v343 = vpop.permute.xlu0 %342
    %345 = vset.pattern.permute.xlu0 1
    %346 = vperm.xlu0 %345, %v23
    %v347 = vpop.permute.xlu0 %346
    %349 = vset.pattern.permute.xlu0 1
    %350 = vperm.xlu0 %349, %v24
    %v351 = vpop.permute.xlu0 %350
    %353 = vset.pattern.permute.xlu0 1
    %354 = vperm.xlu0 %353, %v25
    %v355 = vpop.permute.xlu0 %354
    %357 = vset.pattern.permute.xlu0 1
    %358 = vperm.xlu0 %357, %v26
    %v359 = vpop.permute.xlu0 %358
    %361 = vset.pattern.permute.xlu0 1
    %362 = vperm.xlu0 %361, %v27
    %v363 = vpop.permute.xlu0 %362
    %365 = vset.pattern.permute.xlu0 1
    %366 = vperm.xlu0 %365, %v28
    %v367 = vpop.permute.xlu0 %366
    %369 = vset.pattern.permute.xlu0 1
    %370 = vperm.xlu0 %369, %v29
    %v371 = vpop.permute.xlu0 %370
    %373 = vset.pattern.permute.xlu0 1
    %374 = vperm.xlu0 %373, %v30
    %v375 = vpop.permute.xlu0 %374
    %377 = vset.pattern.permute.xlu0 1
    %378 = vperm.xlu0 %377, %v31
    %v379 = vpop.permute.xlu0 %378
    %381 = vset.pattern.permute.xlu0 1
    %382 = vperm.xlu0 %381, %v32
    %v383 = vpop.permute.xlu0 %382
    %385 = vset.pattern.permute.xlu0 1
    %386 = vperm.xlu0 %385, %v33
    %v387 = vpop.permute.xlu0 %386
    %389 = vset.pattern.permute.xlu0 1
    %390 = vperm.xlu0 %389, %v34
    %v391 = vpop.permute.xlu0 %390
    %393 = vset.pattern.permute.xlu0 1
    %394 = vperm.xlu0 %393, %v35
    %v395 = vpop.permute.xlu0 %394
    %397 = vset.pattern.permute.xlu0 1
    %398 = vperm.xlu0 %397, %v36
    %v399 = vpop.permute.xlu0 %398
    %401 = vset.pattern.permute.xlu0 1
    %402 = vperm.xlu0 %401, %v37
    %v403 = vpop.permute.xlu0 %402
    %v421 = vunpack.c.l.b16 %v317
    %v422 = vunpack.c.l.b16 %v318
    %v423 = vunpack.c.l.b16 %v319
    %v424 = vunpack.c.l.b16 %v320
    %v425 = vunpack.c.l.b16 %v321
    %v426 = vunpack.c.l.b16 %v322
    %v427 = vunpack.c.l.b16 %v323
    %v428 = vunpack.c.l.b16 %v324
    %v429 = vunpack.c.l.b16 %v325
    %v430 = vunpack.c.l.b16 %v326
    %v431 = vunpack.c.l.b16 %v327
    %v432 = vunpack.c.l.b16 %v328
    %v433 = vunpack.c.l.b16 %v329
    %v434 = vunpack.c.l.b16 %v330
    %v435 = vunpack.c.l.b16 %v331
    %v436 = vunpack.c.l.b16 %v332
    %v437 = vpack.c.b16 %v422, %v421
    %v438 = vpack.c.b16 %v424, %v423
    %v439 = vpack.c.b16 %v426, %v425
    %v440 = vpack.c.b16 %v428, %v427
    %v441 = vpack.c.b16 %v430, %v429
    %v442 = vpack.c.b16 %v432, %v431
    %v443 = vpack.c.b16 %v434, %v433
    %v444 = vpack.c.b16 %v436, %v435
    %453 = vmatprep.subr.bf16.mxu0 0
    %454 = vmatpush1.bf16.msra.mxu0 %v333
    %455 = vmatprep.subr.bf16.mxu0 0
    %456 = vmatpush1.bf16.msra.mxu0 %v334
    %457 = vmatprep.subr.bf16.mxu0 0
    %458 = vmatpush1.bf16.msra.mxu0 %v335
    %459 = vmatprep.subr.bf16.mxu0 0
    %460 = vmatpush1.bf16.msra.mxu0 %v336
    %461 = vmatprep.subr.bf16.mxu0 0
    %462 = vmatpush1.bf16.msra.mxu0 %v337
    %463 = vmatprep.subr.bf16.mxu0 0
    %464 = vmatpush1.bf16.msra.mxu0 %v338
    %465 = vmatprep.subr.bf16.mxu0 0
    %466 = vmatpush1.bf16.msra.mxu0 %v339
    %467 = vmatprep.subr.bf16.mxu0 0
    %468 = vmatpush1.bf16.msra.mxu0 %v340
    %469 = vmatprep.subr.bf16.mxu0 0
    %470 = vmatpush1.bf16.msra.mxu0 0
    %471 = vmatprep.subr.bf16.mxu0 0
    %472 = vmatpush1.bf16.msra.mxu0 0
    %473 = vmatprep.subr.bf16.mxu0 0
    %474 = vmatpush1.bf16.msra.mxu0 0
    %475 = vmatprep.subr.bf16.mxu0 0
    %476 = vmatpush1.bf16.msra.mxu0 0
    %477 = vmatprep.subr.bf16.mxu0 0
    %478 = vmatpush1.bf16.msra.mxu0 0
    %479 = vmatprep.subr.bf16.mxu0 0
    %480 = vmatpush1.bf16.msra.mxu0 0
    %481 = vmatprep.subr.bf16.mxu0 0
    %482 = vmatpush1.bf16.msra.mxu0 0
    %483 = vmatprep.subr.bf16.mxu0 0
    %484 = vmatpush1.bf16.msra.mxu0 0
    %485 = vmatprep.mubr.bf16.mxu0 0
    %486 = vmatmul.mubr.bf16.gmra.mrb[0].mxu0 %v437
    %v487 = vpop.f32.mrb[0].mxu0
    %v488 = vadd.f32 %v343, %v487
    %v489 = vpop.f32.mrb[0].mxu0
    %v490 = vpop.f32.mrb[0].mxu0
    %v491 = vadd.f32 %v347, %v490
    %v492 = vpop.f32.mrb[0].mxu0
    %493 = vmatprep.mubr.bf16.mxu0 0
    %494 = vmatmul.mubr.bf16.gmra.mrb[0].mxu0 %v438
    %v495 = vpop.f32.mrb[0].mxu0
    %v496 = vadd.f32 %v351, %v495
    %v497 = vpop.f32.mrb[0].mxu0
    %v498 = vpop.f32.mrb[0].mxu0
    %v499 = vadd.f32 %v355, %v498
    %v500 = vpop.f32.mrb[0].mxu0
    %501 = vmatprep.mubr.bf16.mxu0 0
    %502 = vmatmul.mubr.bf16.gmra.mrb[0].mxu0 %v439
    %v503 = vpop.f32.mrb[0].mxu0
    %v504 = vadd.f32 %v359, %v503
    %v505 = vpop.f32.mrb[0].mxu0
    %v506 = vpop.f32.mrb[0].mxu0
    %v507 = vadd.f32 %v363, %v506
    %v508 = vpop.f32.mrb[0].mxu0
    %509 = vmatprep.mubr.bf16.mxu0 0
    %510 = vmatmul.mubr.bf16.gmra.mrb[0].mxu0 %v440
    %v511 = vpop.f32.mrb[0].mxu0
    %v512 = vadd.f32 %v367, %v511
    %v513 = vpop.f32.mrb[0].mxu0
    %v514 = vpop.f32.mrb[0].mxu0
    %v515 = vadd.f32 %v371, %v514
    %v516 = vpop.f32.mrb[0].mxu0
    %517 = vmatprep.mubr.bf16.mxu0 0
    %518 = vmatmul.mubr.bf16.gmra.mrb[0].mxu0 %v441
    %v519 = vpop.f32.mrb[0].mxu0
    %v520 = vadd.f32 %v375, %v519
    %v521 = vpop.f32.mrb[0].mxu0
    %v522 = vpop.f32.mrb[0].mxu0
    %v523 = vadd.f32 %v379, %v522
    %v524 = vpop.f32.mrb[0].mxu0
    %525 = vmatprep.mubr.bf16.mxu0 0
    %526 = vmatmul.mubr.bf16.gmra.mrb[0].mxu0 %v442
    %v527 = vpop.f32.mrb[0].mxu0
    %v528 = vadd.f32 %v383, %v527
    %v529 = vpop.f32.mrb[0].mxu0
    %v530 = vpop.f32.mrb[0].mxu0
    %v531 = vadd.f32 %v387, %v530
    %v532 = vpop.f32.mrb[0].mxu0
    %533 = vmatprep.mubr.bf16.mxu0 0
    %534 = vmatmul.mubr.bf16.gmra.mrb[0].mxu0 %v443
    %v535 = vpop.f32.mrb[0].mxu0
    %v536 = vadd.f32 %v391, %v535
    %v537 = vpop.f32.mrb[0].mxu0
    %v538 = vpop.f32.mrb[0].mxu0
    %v539 = vadd.f32 %v395, %v538
    %v540 = vpop.f32.mrb[0].mxu0
    %541 = vmatprep.mubr.bf16.mxu0 0
    %542 = vmatmul.mubr.bf16.gmra.mrb[0].mxu0 %v444
    %v543 = vpop.f32.mrb[0].mxu0
    %v544 = vadd.f32 %v399, %v543
    %v545 = vpop.f32.mrb[0].mxu0
    %v546 = vpop.f32.mrb[0].mxu0
    %v547 = vadd.f32 %v403, %v546
    %v548 = vpop.f32.mrb[0].mxu0
    %549 = vdwg.mxu0
    %v550 = vmax.f32 %v488, 0.0
    %v551 = vmax.f32 %v491, 0.0
    %v552 = vmax.f32 %v496, 0.0
    %v553 = vmax.f32 %v499, 0.0
    %v554 = vmax.f32 %v504, 0.0
    %v555 = vmax.f32 %v507, 0.0
    %v556 = vmax.f32 %v512, 0.0
    %v557 = vmax.f32 %v515, 0.0
    %v558 = vmax.f32 %v520, 0.0
    %v559 = vmax.f32 %v523, 0.0
    %v560 = vmax.f32 %v528, 0.0
    %v561 = vmax.f32 %v531, 0.0
    %v562 = vmax.f32 %v536, 0.0
    %v563 = vmax.f32 %v539, 0.0
    %v564 = vmax.f32 %v544, 0.0
    %v565 = vmax.f32 %v547, 0.0
    %v566 = vld [vmem:[%s3] sm:$0xf]
    %v567 = vpack.c.bf16 %v551, %v550
    %v568 = vpack.c.bf16 %v553, %v552
    %v569 = vpack.c.bf16 %v555, %v554
    %v570 = vpack.c.bf16 %v557, %v556
    %v571 = vpack.c.bf16 %v559, %v558
    %v572 = vpack.c.bf16 %v561, %v560
    %v573 = vpack.c.bf16 %v563, %v562
    %v574 = vpack.c.bf16 %v565, %v564
    %575 = vset.pattern.permute.xlu0 2
    %576 = vperm.xlu0 %575, %v22
    %v577 = vpop.permute.xlu0 %576
    %579 = vmatprep.subr.bf16.mxu0 0
    %580 = vmatpush1.bf16.msra.mxu0 %v567
    %581 = vmatprep.subr.bf16.mxu0 0
    %582 = vmatpush1.bf16.msra.mxu0 %v568
    %583 = vmatprep.subr.bf16.mxu0 0
    %584 = vmatpush1.bf16.msra.mxu0 %v569
    %585 = vmatprep.subr.bf16.mxu0 0
    %586 = vmatpush1.bf16.msra.mxu0 %v570
    %587 = vmatprep.subr.bf16.mxu0 0
    %588 = vmatpush1.bf16.msra.mxu0 %v571
    %589 = vmatprep.subr.bf16.mxu0 0
    %590 = vmatpush1.bf16.msra.mxu0 %v572
    %591 = vmatprep.subr.bf16.mxu0 0
    %592 = vmatpush1.bf16.msra.mxu0 %v573
    %593 = vmatprep.subr.bf16.mxu0 0
    %594 = vmatpush1.bf16.msra.mxu0 %v574
    %595 = vmatprep.subr.bf16.mxu0 0
    %596 = vmatpush1.bf16.msra.mxu0 0
    %597 = vmatprep.subr.bf16.mxu0 0
    %598 = vmatpush1.bf16.msra.mxu0 0
    %599 = vmatprep.subr.bf16.mxu0 0
    %600 = vmatpush1.bf16.msra.mxu0 0
    %601 = vmatprep.subr.bf16.mxu0 0
    %602 = vmatpush1.bf16.msra.mxu0 0
    %603 = vmatprep.subr.bf16.mxu0 0
    %604 = vmatpush1.bf16.msra.mxu0 0
    %605 = vmatprep.subr.bf16.mxu0 0
    %606 = vmatpush1.bf16.msra.mxu0 0
    %607 = vmatprep.subr.bf16.mxu0 0
    %608 = vmatpush1.bf16.msra.mxu0 0
    %609 = vmatprep.subr.bf16.mxu0 0
    %610 = vmatpush1.bf16.msra.mxu0 0
    %611 = vmatprep.mubr.bf16.mxu0 0
    %612 = vmatmul.mubr.bf16.gmra.mrb[0].mxu0 %v566
    %v613 = vpop.f32.mrb[0].mxu0
    %v614 = vadd.f32 %v577, %v613
    %v615 = vpop.f32.mrb[0].mxu0
    %v616 = vpop.f32.mrb[0].mxu0
    %v617 = vpop.f32.mrb[0].mxu0
    %618 = vdwg.mxu0
    %619 = vst [vmem:[#allocation2] sm:$0xff] %v614
    // Predicated region
    $region22: #{tpu_custom_call.1} parent=1 // pred_check
      _
    $region23: #{tpu_custom_call.1} parent=1 // pred_check_branch
      %621 = sbr.rel (0) target = $region25
    $region24: #{tpu_custom_call.1} parent=1 // pred_region
      %s623 = ssub.s32 128, 128
      %624 = vsyncadd [#allocation3], %s623
      %s626 = sshll.u32 [#allocation2], 4
      %s627 = int_to_ptr.vmem [resolvable:$true] %s626
      %629 = dma.vmem_to_hbm [thread:$0]  %s627, 128, %s5, [#allocation3]
    $region25: #{tpu_custom_call.1} parent=1 // pred_fallthru
      _
    // Predicated region
    $region26: #{tpu_custom_call.1} parent=1 // pred_check
      _
    $region27: #{tpu_custom_call.1} parent=1 // pred_check_branch
      %631 = sbr.rel (0) target = $region29
    $region28: #{tpu_custom_call.1} parent=1 // pred_region
      %632 = dma.done [#allocation3], 128
    $region29: #{tpu_custom_call.1} parent=1 // pred_fallthru
      _
    %633 = vsyncpa [#allocation3], 1

</llo_original>
